<compile_context>
chip_gen: v5e
topology: v5e:2x2
jax: 0.10.0
libtpu: 0.0.40
codegen_flags: <defaults>
</compile_context>

<pallas_src>
import jax
import jax.numpy as jnp
from jax import lax
from jax.experimental import pallas as pl
from jax.experimental.pallas import tpu as pltpu

EPS = 1e-5
CHUNK = 8          # rows per inner-loop step (one f32 sublane group)
MAX_UNROLL = 8     # bound on inner-loop unrolling (avoid 64x code bloat at tile_r=512+)


def layernorm_kernel(x_ref, gb_ref, o_ref):
    rows, c = x_ref.shape            # static block shape
    inv_c = jnp.float32(1.0 / c)

    # Hoist affine params and their chunk-height broadcast out of the loop
    # (JAX does not CSE broadcast_in_dim across iterations).
    g = jnp.broadcast_to(gb_ref[0:1, :].astype(jnp.float32), (CHUNK, c))
    b = jnp.broadcast_to(gb_ref[1:2, :].astype(jnp.float32), (CHUNK, c))

    def process(r0, h):
        # All arithmetic in f32 (fast path on v5e too); cast only at the store.
        x = x_ref[pl.ds(r0, h), :].astype(jnp.float32)
        # Two-pass statistics: mean, then centered second moment.
        mean = jnp.sum(x, axis=-1, keepdims=True) * inv_c
        xc = x - mean
        var = jnp.sum(xc * xc, axis=-1, keepdims=True) * inv_c
        inv = lax.rsqrt(var + EPS)
        y = xc * inv * g[:h] + b[:h]
        o_ref[pl.ds(r0, h), :] = y.astype(o_ref.dtype)

    num_full = rows // CHUNK
    rem = rows % CHUNK

    if num_full > 0:
        def body(k, carry):
            process(pl.multiple_of(k * CHUNK, CHUNK), CHUNK)
            return carry
        lax.fori_loop(0, num_full, body, 0, unroll=min(MAX_UNROLL, num_full))

    if rem:
        # Static, sublane-aligned remainder chunk — no wrapper-side padding needed.
        process(num_full * CHUNK, rem)


def _pick_tile_rows(R):
    if R <= 256:
        return R                                 # one full-array block, one grid step
    if R <= 2048:
        half = pl.cdiv(pl.cdiv(R, 2), CHUNK) * CHUNK
        return min(1024, half)                   # ~2 "parallel" tiles (v7x 2-TC split)
    return 1024                                  # 4 MiB blocks for big inputs


def layernorm(x, gamma, beta):
    """x: (..., C); gamma/beta: (C,). LayerNorm over the last dim (eps=1e-5)."""
    orig_shape = x.shape
    C = orig_shape[-1]
    R = 1
    for d in orig_shape[:-1]:
        R *= d

    x2 = x.reshape(R, C)
    gb = jnp.concatenate(
        [gamma.reshape(1, C).astype(x.dtype), beta.reshape(1, C).astype(x.dtype)], axis=0)

    tile_r = _pick_tile_rows(R)
    grid = (pl.cdiv(R, tile_r),)
    sem = "parallel" if grid[0] > 1 else "arbitrary"

    compiler_params = pltpu.CompilerParams(
        dimension_semantics=(sem,),
        vmem_limit_bytes=(48 * 1024 * 1024 if tile_r >= 512 else None),
    )

    out = pl.pallas_call(
        layernorm_kernel,
        out_shape=jax.ShapeDtypeStruct((R, C), x.dtype),
        grid_spec=pl.GridSpec(
            grid=grid,
            in_specs=[
                pl.BlockSpec((tile_r, C), lambda i: (i, 0)),
                pl.BlockSpec((2, C), lambda i: (0, 0)),
            ],
            out_specs=pl.BlockSpec((tile_r, C), lambda i: (i, 0)),
        ),
        compiler_params=compiler_params,
    )(x2, gb)

    return out.reshape(orig_shape)


def _reference(x, gamma, beta):
    mean = jnp.mean(x, axis=-1, keepdims=True)
    var = jnp.mean((x - mean) ** 2, axis=-1, keepdims=True)
    return (x - mean) / jnp.sqrt(var + EPS) * gamma + beta


if __name__ == "__main__":
    key = jax.random.PRNGKey(0)
    kx, kg, kb = jax.random.split(key, 3)

    # Shape implied by the module's forward: x556 = [1, 7, 7, 1024]
    x = jax.random.normal(kx, (1, 7, 7, 1024), dtype=jnp.float32)

    # PyTorch LayerNorm default init: gamma=1, beta=0 (matches module M).
    gamma = jnp.ones((1024,), dtype=jnp.float32)
    beta = jnp.zeros((1024,), dtype=jnp.float32)

    y = layernorm(x, gamma, beta)
    jax.block_until_ready(y)
    assert jnp.allclose(y, _reference(x, gamma, beta), atol=2e-5, rtol=1e-5), \
        "mismatch vs reference (default affine)"

    # Exercise the affine path with non-trivial gamma/beta as well.
    gamma_r = jax.random.normal(kg, (1024,), dtype=jnp.float32)
    beta_r = jax.random.normal(kb, (1024,), dtype=jnp.float32)
    y2 = layernorm(x, gamma_r, beta_r)
    jax.block_until_ready(y2)
    assert jnp.allclose(y2, _reference(x, gamma_r, beta_r), atol=2e-5, rtol=1e-5), \
        "mismatch vs reference (random affine)"

    print("KERNEL_OK")
</pallas_src>

<mosaic_0001>
module attributes {stable_mosaic.version = 11 : i64} {
  func.func @layernorm_kernel(%arg0: i32, %arg1: memref<49x1024xf32, #tpu.memory_space<vmem>>, %arg2: memref<2x1024xf32, #tpu.memory_space<vmem>>, %arg3: memref<49x1024xf32, #tpu.memory_space<vmem>>) attributes {dimension_semantics = [#tpu.dimension_semantics<arbitrary>], iteration_bounds = array<i64: 1>, scalar_prefetch = 0 : i64, scratch_operands = 0 : i64, tpu.core_type = #tpu.core_type<tc>, window_params = [{transform_indices = @transform_0, window_bounds = array<i64: 49, 1024>}, {pipeline_mode = #tpu.pipeline_mode<synchronous>, transform_indices = @transform_1, window_bounds = array<i64: 2, 1024>}, {transform_indices = @transform_2, window_bounds = array<i64: 49, 1024>}]} {
    %c0 = arith.constant 0 : index
    %c0_0 = arith.constant 0 : index
    %0 = vector.load %arg2[%c0, %c0_0] : memref<2x1024xf32, #tpu.memory_space<vmem>>, vector<1x1024xf32>
    %1 = vector.shape_cast %0 : vector<1x1024xf32> to vector<1x1024xf32>
    %2 = vector.broadcast %1 : vector<1x1024xf32> to vector<8x1024xf32>
    %c1 = arith.constant 1 : index
    %c0_1 = arith.constant 0 : index
    %3 = vector.load %arg2[%c1, %c0_1] : memref<2x1024xf32, #tpu.memory_space<vmem>>, vector<1x1024xf32>
    %4 = vector.shape_cast %3 : vector<1x1024xf32> to vector<1x1024xf32>
    %5 = vector.broadcast %4 : vector<1x1024xf32> to vector<8x1024xf32>
    %cst = arith.constant 9.765625E-4 : f32
    %c0_i32 = arith.constant 0 : i32
    %c8_i32 = arith.constant 8 : i32
    %6 = arith.muli %c0_i32, %c8_i32 : i32
    %7 = tpu.assume_multiple %6, 8 : i32
    %8 = arith.index_cast %7 : i32 to index
    %c0_2 = arith.constant 0 : index
    %9 = vector.load %arg1[%8, %c0_2] : memref<49x1024xf32, #tpu.memory_space<vmem>>, vector<8x1024xf32>
    %cst_3 = arith.constant dense<0.000000e+00> : vector<8xf32>
    %10 = vector.multi_reduction <add>, %9, %cst_3 [1] : vector<8x1024xf32> to vector<8xf32>
    %11 = vector.shape_cast %10 : vector<8xf32> to vector<8x1xf32>
    %12 = vector.broadcast %cst : f32 to vector<8x1xf32>
    %13 = arith.mulf %11, %12 : vector<8x1xf32>
    %14 = vector.broadcast %13 : vector<8x1xf32> to vector<8x1024xf32>
    %15 = arith.subf %9, %14 : vector<8x1024xf32>
    %16 = arith.mulf %15, %15 : vector<8x1024xf32>
    %cst_4 = arith.constant dense<0.000000e+00> : vector<8xf32>
    %17 = vector.multi_reduction <add>, %16, %cst_4 [1] : vector<8x1024xf32> to vector<8xf32>
    %18 = vector.shape_cast %17 : vector<8xf32> to vector<8x1xf32>
    %19 = vector.broadcast %cst : f32 to vector<8x1xf32>
    %20 = arith.mulf %18, %19 : vector<8x1xf32>
    %cst_5 = arith.constant 9.99999974E-6 : f32
    %21 = vector.broadcast %cst_5 : f32 to vector<8x1xf32>
    %22 = arith.addf %20, %21 : vector<8x1xf32>
    %23 = math.rsqrt %22 : vector<8x1xf32>
    %24 = vector.broadcast %23 : vector<8x1xf32> to vector<8x1024xf32>
    %25 = arith.mulf %15, %24 : vector<8x1024xf32>
    %26 = arith.mulf %25, %2 : vector<8x1024xf32>
    %27 = arith.addf %26, %5 : vector<8x1024xf32>
    %28 = arith.index_cast %7 : i32 to index
    %c0_6 = arith.constant 0 : index
    %29 = vector.load %arg3[%28, %c0_6] : memref<49x1024xf32, #tpu.memory_space<vmem>>, vector<8x1024xf32>
    tpu.vector_store %arg3[%28, %c0_6], %27 {strides = array<i32>} : memref<49x1024xf32, #tpu.memory_space<vmem>>, vector<8x1024xf32>,
    %c1_i32 = arith.constant 1 : i32
    %c8_i32_7 = arith.constant 8 : i32
    %30 = arith.muli %c1_i32, %c8_i32_7 : i32
    %31 = tpu.assume_multiple %30, 8 : i32
    %32 = arith.index_cast %31 : i32 to index
    %c0_8 = arith.constant 0 : index
    %33 = vector.load %arg1[%32, %c0_8] : memref<49x1024xf32, #tpu.memory_space<vmem>>, vector<8x1024xf32>
    %cst_9 = arith.constant dense<0.000000e+00> : vector<8xf32>
    %34 = vector.multi_reduction <add>, %33, %cst_9 [1] : vector<8x1024xf32> to vector<8xf32>
    %35 = vector.shape_cast %34 : vector<8xf32> to vector<8x1xf32>
    %36 = vector.broadcast %cst : f32 to vector<8x1xf32>
    %37 = arith.mulf %35, %36 : vector<8x1xf32>
    %38 = vector.broadcast %37 : vector<8x1xf32> to vector<8x1024xf32>
    %39 = arith.subf %33, %38 : vector<8x1024xf32>
    %40 = arith.mulf %39, %39 : vector<8x1024xf32>
    %cst_10 = arith.constant dense<0.000000e+00> : vector<8xf32>
    %41 = vector.multi_reduction <add>, %40, %cst_10 [1] : vector<8x1024xf32> to vector<8xf32>
    %42 = vector.shape_cast %41 : vector<8xf32> to vector<8x1xf32>
    %43 = vector.broadcast %cst : f32 to vector<8x1xf32>
    %44 = arith.mulf %42, %43 : vector<8x1xf32>
    %cst_11 = arith.constant 9.99999974E-6 : f32
    %45 = vector.broadcast %cst_11 : f32 to vector<8x1xf32>
    %46 = arith.addf %44, %45 : vector<8x1xf32>
    %47 = math.rsqrt %46 : vector<8x1xf32>
    %48 = vector.broadcast %47 : vector<8x1xf32> to vector<8x1024xf32>
    %49 = arith.mulf %39, %48 : vector<8x1024xf32>
    %50 = arith.mulf %49, %2 : vector<8x1024xf32>
    %51 = arith.addf %50, %5 : vector<8x1024xf32>
    %52 = arith.index_cast %31 : i32 to index
    %c0_12 = arith.constant 0 : index
    %53 = vector.load %arg3[%52, %c0_12] : memref<49x1024xf32, #tpu.memory_space<vmem>>, vector<8x1024xf32>
    tpu.vector_store %arg3[%52, %c0_12], %51 {strides = array<i32>} : memref<49x1024xf32, #tpu.memory_space<vmem>>, vector<8x1024xf32>,
    %c2_i32 = arith.constant 2 : i32
    %c8_i32_13 = arith.constant 8 : i32
    %54 = arith.muli %c2_i32, %c8_i32_13 : i32
    %55 = tpu.assume_multiple %54, 8 : i32
    %56 = arith.index_cast %55 : i32 to index
    %c0_14 = arith.constant 0 : index
    %57 = vector.load %arg1[%56, %c0_14] : memref<49x1024xf32, #tpu.memory_space<vmem>>, vector<8x1024xf32>
    %cst_15 = arith.constant dense<0.000000e+00> : vector<8xf32>
    %58 = vector.multi_reduction <add>, %57, %cst_15 [1] : vector<8x1024xf32> to vector<8xf32>
    %59 = vector.shape_cast %58 : vector<8xf32> to vector<8x1xf32>
    %60 = vector.broadcast %cst : f32 to vector<8x1xf32>
    %61 = arith.mulf %59, %60 : vector<8x1xf32>
    %62 = vector.broadcast %61 : vector<8x1xf32> to vector<8x1024xf32>
    %63 = arith.subf %57, %62 : vector<8x1024xf32>
    %64 = arith.mulf %63, %63 : vector<8x1024xf32>
    %cst_16 = arith.constant dense<0.000000e+00> : vector<8xf32>
    %65 = vector.multi_reduction <add>, %64, %cst_16 [1] : vector<8x1024xf32> to vector<8xf32>
    %66 = vector.shape_cast %65 : vector<8xf32> to vector<8x1xf32>
    %67 = vector.broadcast %cst : f32 to vector<8x1xf32>
    %68 = arith.mulf %66, %67 : vector<8x1xf32>
    %cst_17 = arith.constant 9.99999974E-6 : f32
    %69 = vector.broadcast %cst_17 : f32 to vector<8x1xf32>
    %70 = arith.addf %68, %69 : vector<8x1xf32>
    %71 = math.rsqrt %70 : vector<8x1xf32>
    %72 = vector.broadcast %71 : vector<8x1xf32> to vector<8x1024xf32>
    %73 = arith.mulf %63, %72 : vector<8x1024xf32>
    %74 = arith.mulf %73, %2 : vector<8x1024xf32>
    %75 = arith.addf %74, %5 : vector<8x1024xf32>
    %76 = arith.index_cast %55 : i32 to index
    %c0_18 = arith.constant 0 : index
    %77 = vector.load %arg3[%76, %c0_18] : memref<49x1024xf32, #tpu.memory_space<vmem>>, vector<8x1024xf32>
    tpu.vector_store %arg3[%76, %c0_18], %75 {strides = array<i32>} : memref<49x1024xf32, #tpu.memory_space<vmem>>, vector<8x1024xf32>,
    %c3_i32 = arith.constant 3 : i32
    %c8_i32_19 = arith.constant 8 : i32
    %78 = arith.muli %c3_i32, %c8_i32_19 : i32
    %79 = tpu.assume_multiple %78, 8 : i32
    %80 = arith.index_cast %79 : i32 to index
    %c0_20 = arith.constant 0 : index
    %81 = vector.load %arg1[%80, %c0_20] : memref<49x1024xf32, #tpu.memory_space<vmem>>, vector<8x1024xf32>
    %cst_21 = arith.constant dense<0.000000e+00> : vector<8xf32>
    %82 = vector.multi_reduction <add>, %81, %cst_21 [1] : vector<8x1024xf32> to vector<8xf32>
    %83 = vector.shape_cast %82 : vector<8xf32> to vector<8x1xf32>
    %84 = vector.broadcast %cst : f32 to vector<8x1xf32>
    %85 = arith.mulf %83, %84 : vector<8x1xf32>
    %86 = vector.broadcast %85 : vector<8x1xf32> to vector<8x1024xf32>
    %87 = arith.subf %81, %86 : vector<8x1024xf32>
    %88 = arith.mulf %87, %87 : vector<8x1024xf32>
    %cst_22 = arith.constant dense<0.000000e+00> : vector<8xf32>
    %89 = vector.multi_reduction <add>, %88, %cst_22 [1] : vector<8x1024xf32> to vector<8xf32>
    %90 = vector.shape_cast %89 : vector<8xf32> to vector<8x1xf32>
    %91 = vector.broadcast %cst : f32 to vector<8x1xf32>
    %92 = arith.mulf %90, %91 : vector<8x1xf32>
    %cst_23 = arith.constant 9.99999974E-6 : f32
    %93 = vector.broadcast %cst_23 : f32 to vector<8x1xf32>
    %94 = arith.addf %92, %93 : vector<8x1xf32>
    %95 = math.rsqrt %94 : vector<8x1xf32>
    %96 = vector.broadcast %95 : vector<8x1xf32> to vector<8x1024xf32>
    %97 = arith.mulf %87, %96 : vector<8x1024xf32>
    %98 = arith.mulf %97, %2 : vector<8x1024xf32>
    %99 = arith.addf %98, %5 : vector<8x1024xf32>
    %100 = arith.index_cast %79 : i32 to index
    %c0_24 = arith.constant 0 : index
    %101 = vector.load %arg3[%100, %c0_24] : memref<49x1024xf32, #tpu.memory_space<vmem>>, vector<8x1024xf32>
    tpu.vector_store %arg3[%100, %c0_24], %99 {strides = array<i32>} : memref<49x1024xf32, #tpu.memory_space<vmem>>, vector<8x1024xf32>,
    %c4_i32 = arith.constant 4 : i32
    %c8_i32_25 = arith.constant 8 : i32
    %102 = arith.muli %c4_i32, %c8_i32_25 : i32
    %103 = tpu.assume_multiple %102, 8 : i32
    %104 = arith.index_cast %103 : i32 to index
    %c0_26 = arith.constant 0 : index
    %105 = vector.load %arg1[%104, %c0_26] : memref<49x1024xf32, #tpu.memory_space<vmem>>, vector<8x1024xf32>
    %cst_27 = arith.constant dense<0.000000e+00> : vector<8xf32>
    %106 = vector.multi_reduction <add>, %105, %cst_27 [1] : vector<8x1024xf32> to vector<8xf32>
    %107 = vector.shape_cast %106 : vector<8xf32> to vector<8x1xf32>
    %108 = vector.broadcast %cst : f32 to vector<8x1xf32>
    %109 = arith.mulf %107, %108 : vector<8x1xf32>
    %110 = vector.broadcast %109 : vector<8x1xf32> to vector<8x1024xf32>
    %111 = arith.subf %105, %110 : vector<8x1024xf32>
    %112 = arith.mulf %111, %111 : vector<8x1024xf32>
    %cst_28 = arith.constant dense<0.000000e+00> : vector<8xf32>
    %113 = vector.multi_reduction <add>, %112, %cst_28 [1] : vector<8x1024xf32> to vector<8xf32>
    %114 = vector.shape_cast %113 : vector<8xf32> to vector<8x1xf32>
    %115 = vector.broadcast %cst : f32 to vector<8x1xf32>
    %116 = arith.mulf %114, %115 : vector<8x1xf32>
    %cst_29 = arith.constant 9.99999974E-6 : f32
    %117 = vector.broadcast %cst_29 : f32 to vector<8x1xf32>
    %118 = arith.addf %116, %117 : vector<8x1xf32>
    %119 = math.rsqrt %118 : vector<8x1xf32>
    %120 = vector.broadcast %119 : vector<8x1xf32> to vector<8x1024xf32>
    %121 = arith.mulf %111, %120 : vector<8x1024xf32>
    %122 = arith.mulf %121, %2 : vector<8x1024xf32>
    %123 = arith.addf %122, %5 : vector<8x1024xf32>
    %124 = arith.index_cast %103 : i32 to index
    %c0_30 = arith.constant 0 : index
    %125 = vector.load %arg3[%124, %c0_30] : memref<49x1024xf32, #tpu.memory_space<vmem>>, vector<8x1024xf32>
    tpu.vector_store %arg3[%124, %c0_30], %123 {strides = array<i32>} : memref<49x1024xf32, #tpu.memory_space<vmem>>, vector<8x1024xf32>,
    %c5_i32 = arith.constant 5 : i32
    %c8_i32_31 = arith.constant 8 : i32
    %126 = arith.muli %c5_i32, %c8_i32_31 : i32
    %127 = tpu.assume_multiple %126, 8 : i32
    %128 = arith.index_cast %127 : i32 to index
    %c0_32 = arith.constant 0 : index
    %129 = vector.load %arg1[%128, %c0_32] : memref<49x1024xf32, #tpu.memory_space<vmem>>, vector<8x1024xf32>
    %cst_33 = arith.constant dense<0.000000e+00> : vector<8xf32>
    %130 = vector.multi_reduction <add>, %129, %cst_33 [1] : vector<8x1024xf32> to vector<8xf32>
    %131 = vector.shape_cast %130 : vector<8xf32> to vector<8x1xf32>
    %132 = vector.broadcast %cst : f32 to vector<8x1xf32>
    %133 = arith.mulf %131, %132 : vector<8x1xf32>
    %134 = vector.broadcast %133 : vector<8x1xf32> to vector<8x1024xf32>
    %135 = arith.subf %129, %134 : vector<8x1024xf32>
    %136 = arith.mulf %135, %135 : vector<8x1024xf32>
    %cst_34 = arith.constant dense<0.000000e+00> : vector<8xf32>
    %137 = vector.multi_reduction <add>, %136, %cst_34 [1] : vector<8x1024xf32> to vector<8xf32>
    %138 = vector.shape_cast %137 : vector<8xf32> to vector<8x1xf32>
    %139 = vector.broadcast %cst : f32 to vector<8x1xf32>
    %140 = arith.mulf %138, %139 : vector<8x1xf32>
    %cst_35 = arith.constant 9.99999974E-6 : f32
    %141 = vector.broadcast %cst_35 : f32 to vector<8x1xf32>
    %142 = arith.addf %140, %141 : vector<8x1xf32>
    %143 = math.rsqrt %142 : vector<8x1xf32>
    %144 = vector.broadcast %143 : vector<8x1xf32> to vector<8x1024xf32>
    %145 = arith.mulf %135, %144 : vector<8x1024xf32>
    %146 = arith.mulf %145, %2 : vector<8x1024xf32>
    %147 = arith.addf %146, %5 : vector<8x1024xf32>
    %148 = arith.index_cast %127 : i32 to index
    %c0_36 = arith.constant 0 : index
    %149 = vector.load %arg3[%148, %c0_36] : memref<49x1024xf32, #tpu.memory_space<vmem>>, vector<8x1024xf32>
    tpu.vector_store %arg3[%148, %c0_36], %147 {strides = array<i32>} : memref<49x1024xf32, #tpu.memory_space<vmem>>, vector<8x1024xf32>,
    %c6_i32 = arith.constant 6 : i32
    %c48 = arith.constant 48 : index
    %c0_37 = arith.constant 0 : index
    %150 = vector.load %arg1[%c48, %c0_37] : memref<49x1024xf32, #tpu.memory_space<vmem>>, vector<1x1024xf32>
    %cst_38 = arith.constant dense<0.000000e+00> : vector<1xf32>
    %151 = vector.multi_reduction <add>, %150, %cst_38 [1] : vector<1x1024xf32> to vector<1xf32>
    %152 = vector.shape_cast %151 : vector<1xf32> to vector<1x1xf32>
    %cst_39 = arith.constant 9.765625E-4 : f32
    %153 = vector.broadcast %cst_39 : f32 to vector<1x1xf32>
    %154 = arith.mulf %152, %153 : vector<1x1xf32>
    %155 = vector.broadcast %154 : vector<1x1xf32> to vector<1x1024xf32>
    %156 = arith.subf %150, %155 : vector<1x1024xf32>
    %157 = arith.mulf %156, %156 : vector<1x1024xf32>
    %cst_40 = arith.constant dense<0.000000e+00> : vector<1xf32>
    %158 = vector.multi_reduction <add>, %157, %cst_40 [1] : vector<1x1024xf32> to vector<1xf32>
    %159 = vector.shape_cast %158 : vector<1xf32> to vector<1x1xf32>
    %cst_41 = arith.constant 9.765625E-4 : f32
    %160 = vector.broadcast %cst_41 : f32 to vector<1x1xf32>
    %161 = arith.mulf %159, %160 : vector<1x1xf32>
    %cst_42 = arith.constant 9.99999974E-6 : f32
    %162 = vector.broadcast %cst_42 : f32 to vector<1x1xf32>
    %163 = arith.addf %161, %162 : vector<1x1xf32>
    %164 = math.rsqrt %163 : vector<1x1xf32>
    %165 = vector.broadcast %164 : vector<1x1xf32> to vector<1x1024xf32>
    %166 = arith.mulf %156, %165 : vector<1x1024xf32>
    %167 = vector.extract_strided_slice %2 {offsets = [0, 0], sizes = [1, 1024], strides = [1, 1]} : vector<8x1024xf32> to vector<1x1024xf32>
    %168 = arith.mulf %166, %167 : vector<1x1024xf32>
    %169 = vector.extract_strided_slice %5 {offsets = [0, 0], sizes = [1, 1024], strides = [1, 1]} : vector<8x1024xf32> to vector<1x1024xf32>
    %170 = arith.addf %168, %169 : vector<1x1024xf32>
    %c48_43 = arith.constant 48 : index
    %c0_44 = arith.constant 0 : index
    %171 = vector.load %arg3[%c48_43, %c0_44] : memref<49x1024xf32, #tpu.memory_space<vmem>>, vector<1x1024xf32>
    tpu.vector_store %arg3[%c48_43, %c0_44], %170 {strides = array<i32>} : memref<49x1024xf32, #tpu.memory_space<vmem>>, vector<1x1024xf32>,
    return
  }
  func.func @transform_0(%arg0: i32) -> (i32, i32) {
    %c0_i32 = arith.constant 0 : i32
    %c0_i32_0 = arith.constant 0 : i32
    return %arg0, %c0_i32 : i32, i32
  }
  func.func @transform_1(%arg0: i32) -> (i32, i32) {
    %c0_i32 = arith.constant 0 : i32
    %c0_i32_0 = arith.constant 0 : i32
    %c0_i32_1 = arith.constant 0 : i32
    return %c0_i32, %c0_i32_0 : i32, i32
  }
  func.func @transform_2(%arg0: i32) -> (i32, i32) {
    %c0_i32 = arith.constant 0 : i32
    %c0_i32_0 = arith.constant 0 : i32
    return %arg0, %c0_i32 : i32, i32
  }
}

</mosaic_0001>

<llo_original>
// kernel: tpu_custom_call.1
$region0: #{tpu_custom_call.1}
  #allocation0 [shape = 'u32[]', space=smem, size = 0x4, offset = 0x4, fixed_abs, tag = 'smem constant byte address 0x4 - core index']
  #allocation1 [shape = 'u32[72,128]{1,0:T(1,128)}', space=vmem, size = 0x9000, scoped, tag = 'internal scratch']
  %s0 = inlined_call_operand.hbm [shape: f32[49,1024], index: 0, kind: input, shape index: {}]
  %s1 = inlined_call_operand.hbm [shape: f32[2,1024], index: 1, kind: input, shape index: {}]
  %s2 = inlined_call_operand.hbm [shape: f32[49,1024], index: 2, kind: output, shape index: {}]
  %s3 = sld [smem:[#allocation0]]
  $region26: #{tpu_custom_call.1} parent=0
    _
  %s5 = ssub.s32 1, %s3
  %s6 = scalar_select 0, %s5, %s3
  $region1: #{tpu_custom_call.1} parent=0
    #allocation2 [shape = 'u8[229376]{0}', space=vmem, size = 0x38000, scoped, tag = 'input window, operand 0, single buffered']
    #allocation3 [shape = 's32[1]{0}', space=sflag, size = 0x4, scoped, tag = 'scoped memory for tpu_custom_call.1']
    #allocation4 [shape = 's32[1]{0}', space=sflag, size = 0x4, scoped, tag = 'scoped memory for tpu_custom_call.1']
    #allocation5 [shape = 'u8[8192]{0}', space=vmem, size = 0x2000, scoped, tag = 'input window, operand 1, single buffered']
    #allocation6 [shape = 's32[1]{0}', space=sflag, size = 0x4, scoped, tag = 'scoped memory for tpu_custom_call.1']
    #allocation7 [shape = 'u8[229376]{0}', space=vmem, size = 0x38000, scoped, tag = 'output window, operand 0, single buffered']
    %7 = vsyncpa [#allocation3], 0
    %8 = vsyncpa [#allocation6], 0
    %9 = vsyncpa [#allocation4], 0
    // Predicated region
    $region2: #{tpu_custom_call.1} parent=1 // pred_check
      _
    $region3: #{tpu_custom_call.1} parent=1 // pred_check_branch
      %11 = sbr.rel (0) target = $region5
    $region4: #{tpu_custom_call.1} parent=1 // pred_region
      %13 = vsyncadd [#allocation3], 0
      %s14 = sshll.u32 %s0, 4
      %s15 = int_to_ptr.hbm [resolvable:$true] %s14
      %s16 = sshll.u32 [#allocation2], 4
      %s17 = int_to_ptr.vmem [resolvable:$true] %s16
      %22 = dma.hbm_to_vmem [thread:$0]  %s15, 7168, %s17, [#allocation3], 1024, 1024, 64
    $region5: #{tpu_custom_call.1} parent=1 // pred_fallthru
      _
    // Predicated region
    $region6: #{tpu_custom_call.1} parent=1 // pred_check
      _
    $region7: #{tpu_custom_call.1} parent=1 // pred_check_branch
      %24 = sbr.rel (0) target = $region9
    $region8: #{tpu_custom_call.1} parent=1 // pred_region
      %26 = vsyncadd [#allocation6], 0
      %s28 = sshll.u32 %s1, 4
      %s29 = int_to_ptr.hbm [resolvable:$true] %s28
      %s30 = sshll.u32 [#allocation5], 4
      %s31 = int_to_ptr.vmem [resolvable:$true] %s30
      %33 = dma.hbm_to_vmem [thread:$0]  %s29, 256, %s31, [#allocation6]
    $region9: #{tpu_custom_call.1} parent=1 // pred_fallthru
      _
    // Predicated region
    $region10: #{tpu_custom_call.1} parent=1 // pred_check
      _
    $region11: #{tpu_custom_call.1} parent=1 // pred_check_branch
      %35 = sbr.rel (0) target = $region13
    $region12: #{tpu_custom_call.1} parent=1 // pred_region
      %37 = dma.done [#allocation3], 7168
    $region13: #{tpu_custom_call.1} parent=1 // pred_fallthru
      _
    // Predicated region
    $region14: #{tpu_custom_call.1} parent=1 // pred_check
      _
    $region15: #{tpu_custom_call.1} parent=1 // pred_check_branch
      %39 = sbr.rel (0) target = $region17
    $region16: #{tpu_custom_call.1} parent=1 // pred_region
      %41 = dma.done [#allocation6], 256
    $region17: #{tpu_custom_call.1} parent=1 // pred_fallthru
      _
    %v42 = vld [vmem:[#allocation5] ss:$2 sm:$0xff]
    %v44 = vperm.slane %v42, 0
    %v45 = vperm.slane %v42, 1
    %v46 = vperm.slane %v42, 2
    %v47 = vperm.slane %v42, 3
    %v48 = vperm.slane %v42, 4
    %v49 = vperm.slane %v42, 5
    %v50 = vperm.slane %v42, 6
    %v51 = vperm.slane %v42, 7
    %s60 = scalar_lea.vmem [#allocation5], 1
    %v61 = vld [vmem:[%s60] ss:$2 sm:$0xff]
    %v63 = vperm.slane %v61, 0
    %v64 = vperm.slane %v61, 1
    %v65 = vperm.slane %v61, 2
    %v66 = vperm.slane %v61, 3
    %v67 = vperm.slane %v61, 4
    %v68 = vperm.slane %v61, 5
    %v69 = vperm.slane %v61, 6
    %v70 = vperm.slane %v61, 7
    %s79 = smul.u32 0, 8
    %s80 = smul.addr %s79, 8
    %s81 = scalar_lea.vmem [#allocation2], %s80
    %v82 = vld [vmem:[%s81] sm:$0xff]
    %v83 = vld [vmem:[%s81 + $0x8] sm:$0xff]
    %v84 = vld [vmem:[%s81 + $0x10] sm:$0xff]
    %v85 = vld [vmem:[%s81 + $0x18] sm:$0xff]
    %v86 = vld [vmem:[%s81 + $0x20] sm:$0xff]
    %v87 = vld [vmem:[%s81 + $0x28] sm:$0xff]
    %v88 = vld [vmem:[%s81 + $0x30] sm:$0xff]
    %v89 = vld [vmem:[%s81 + $0x38] sm:$0xff]
    %v90 = vadd.f32 %v82, %v83
    %v91 = vadd.f32 %v90, %v84
    %v92 = vadd.f32 %v91, %v85
    %v93 = vadd.f32 %v92, %v86
    %v94 = vadd.f32 %v93, %v87
    %v95 = vadd.f32 %v94, %v88
    %v96 = vadd.f32 %v95, %v89
    %97 = vadd.xlane.f32.xlu0 %v96
    %v98 = vpop.xlane.xlu0 %97
    %v99 = vmul.f32 %v98, 0.0009765625
    %v100 = vsub.f32 %v82, %v99
    %v101 = vsub.f32 %v83, %v99
    %v102 = vsub.f32 %v84, %v99
    %v103 = vsub.f32 %v85, %v99
    %v104 = vsub.f32 %v86, %v99
    %v105 = vsub.f32 %v87, %v99
    %v106 = vsub.f32 %v88, %v99
    %v107 = vsub.f32 %v89, %v99
    %v108 = vmul.f32 %v100, %v100
    %v109 = vmul.f32 %v101, %v101
    %v110 = vmul.f32 %v102, %v102
    %v111 = vmul.f32 %v103, %v103
    %v112 = vmul.f32 %v104, %v104
    %v113 = vmul.f32 %v105, %v105
    %v114 = vmul.f32 %v106, %v106
    %v115 = vmul.f32 %v107, %v107
    %v116 = vadd.f32 %v108, %v109
    %v117 = vadd.f32 %v116, %v110
    %v118 = vadd.f32 %v117, %v111
    %v119 = vadd.f32 %v118, %v112
    %v120 = vadd.f32 %v119, %v113
    %v121 = vadd.f32 %v120, %v114
    %v122 = vadd.f32 %v121, %v115
    %123 = vadd.xlane.f32.xlu0 %v122
    %v124 = vpop.xlane.xlu0 %123
    %v125 = vmul.f32 %v124, 0.0009765625
    %v126 = vadd.f32 %v125, 1e-05
    %v127 = vrsqrt.pop %v126
    %v128 = vmul.f32 %v127, %v126
    %v129 = vmul.f32 %v128, %v127
    %v130 = vmul.f32 0.5, %v129
    %v131 = vsub.f32 1.5, %v130
    %v132 = vmul.f32 %v127, %v131
    %vm133 = vweird.f32 %v126
    %vm134 = vweird.f32 %v127
    %vm135 = vmor %vm133, %vm134
    %v136 = vsel %vm135, %v127, %v132
    %v137 = vmul.f32 %v100, %v136
    %v138 = vmul.f32 %v101, %v136
    %v139 = vmul.f32 %v102, %v136
    %v140 = vmul.f32 %v103, %v136
    %v141 = vmul.f32 %v104, %v136
    %v142 = vmul.f32 %v105, %v136
    %v143 = vmul.f32 %v106, %v136
    %v144 = vmul.f32 %v107, %v136
    %v145 = vmul.f32 %v137, %v44
    %v146 = vmul.f32 %v138, %v45
    %v147 = vmul.f32 %v139, %v46
    %v148 = vmul.f32 %v140, %v47
    %v149 = vmul.f32 %v141, %v48
    %v150 = vmul.f32 %v142, %v49
    %v151 = vmul.f32 %v143, %v50
    %v152 = vmul.f32 %v144, %v51
    %v153 = vadd.f32 %v145, %v63
    %v154 = vadd.f32 %v146, %v64
    %v155 = vadd.f32 %v147, %v65
    %v156 = vadd.f32 %v148, %v66
    %v157 = vadd.f32 %v149, %v67
    %v158 = vadd.f32 %v150, %v68
    %v159 = vadd.f32 %v151, %v69
    %v160 = vadd.f32 %v152, %v70
    %s161 = smul.addr %s79, 8
    %s162 = scalar_lea.vmem [#allocation7], %s161
    %163 = vst [vmem:[%s162] sm:$0xff] %v153
    %164 = vst [vmem:[%s162 + $0x8] sm:$0xff] %v154
    %165 = vst [vmem:[%s162 + $0x10] sm:$0xff] %v155
    %166 = vst [vmem:[%s162 + $0x18] sm:$0xff] %v156
    %167 = vst [vmem:[%s162 + $0x20] sm:$0xff] %v157
    %168 = vst [vmem:[%s162 + $0x28] sm:$0xff] %v158
    %169 = vst [vmem:[%s162 + $0x30] sm:$0xff] %v159
    %170 = vst [vmem:[%s162 + $0x38] sm:$0xff] %v160
    %s171 = smul.u32 1, 8
    %s172 = smul.addr %s171, 8
    %s173 = scalar_lea.vmem [#allocation2], %s172
    %v174 = vld [vmem:[%s173] sm:$0xff]
    %v175 = vld [vmem:[%s173 + $0x8] sm:$0xff]
    %v176 = vld [vmem:[%s173 + $0x10] sm:$0xff]
    %v177 = vld [vmem:[%s173 + $0x18] sm:$0xff]
    %v178 = vld [vmem:[%s173 + $0x20] sm:$0xff]
    %v179 = vld [vmem:[%s173 + $0x28] sm:$0xff]
    %v180 = vld [vmem:[%s173 + $0x30] sm:$0xff]
    %v181 = vld [vmem:[%s173 + $0x38] sm:$0xff]
    %v182 = vadd.f32 %v174, %v175
    %v183 = vadd.f32 %v182, %v176
    %v184 = vadd.f32 %v183, %v177
    %v185 = vadd.f32 %v184, %v178
    %v186 = vadd.f32 %v185, %v179
    %v187 = vadd.f32 %v186, %v180
    %v188 = vadd.f32 %v187, %v181
    %189 = vadd.xlane.f32.xlu0 %v188
    %v190 = vpop.xlane.xlu0 %189
    %v191 = vmul.f32 %v190, 0.0009765625
    %v192 = vsub.f32 %v174, %v191
    %v193 = vsub.f32 %v175, %v191
    %v194 = vsub.f32 %v176, %v191
    %v195 = vsub.f32 %v177, %v191
    %v196 = vsub.f32 %v178, %v191
    %v197 = vsub.f32 %v179, %v191
    %v198 = vsub.f32 %v180, %v191
    %v199 = vsub.f32 %v181, %v191
    %v200 = vmul.f32 %v192, %v192
    %v201 = vmul.f32 %v193, %v193
    %v202 = vmul.f32 %v194, %v194
    %v203 = vmul.f32 %v195, %v195
    %v204 = vmul.f32 %v196, %v196
    %v205 = vmul.f32 %v197, %v197
    %v206 = vmul.f32 %v198, %v198
    %v207 = vmul.f32 %v199, %v199
    %v208 = vadd.f32 %v200, %v201
    %v209 = vadd.f32 %v208, %v202
    %v210 = vadd.f32 %v209, %v203
    %v211 = vadd.f32 %v210, %v204
    %v212 = vadd.f32 %v211, %v205
    %v213 = vadd.f32 %v212, %v206
    %v214 = vadd.f32 %v213, %v207
    %215 = vadd.xlane.f32.xlu0 %v214
    %v216 = vpop.xlane.xlu0 %215
    %v217 = vmul.f32 %v216, 0.0009765625
    %v218 = vadd.f32 %v217, 1e-05
    %v219 = vrsqrt.pop %v218
    %v220 = vmul.f32 %v219, %v218
    %v221 = vmul.f32 %v220, %v219
    %v222 = vmul.f32 0.5, %v221
    %v223 = vsub.f32 1.5, %v222
    %v224 = vmul.f32 %v219, %v223
    %vm225 = vweird.f32 %v218
    %vm226 = vweird.f32 %v219
    %vm227 = vmor %vm225, %vm226
    %v228 = vsel %vm227, %v219, %v224
    %v229 = vmul.f32 %v192, %v228
    %v230 = vmul.f32 %v193, %v228
    %v231 = vmul.f32 %v194, %v228
    %v232 = vmul.f32 %v195, %v228
    %v233 = vmul.f32 %v196, %v228
    %v234 = vmul.f32 %v197, %v228
    %v235 = vmul.f32 %v198, %v228
    %v236 = vmul.f32 %v199, %v228
    %v237 = vmul.f32 %v229, %v44
    %v238 = vmul.f32 %v230, %v45
    %v239 = vmul.f32 %v231, %v46
    %v240 = vmul.f32 %v232, %v47
    %v241 = vmul.f32 %v233, %v48
    %v242 = vmul.f32 %v234, %v49
    %v243 = vmul.f32 %v235, %v50
    %v244 = vmul.f32 %v236, %v51
    %v245 = vadd.f32 %v237, %v63
    %v246 = vadd.f32 %v238, %v64
    %v247 = vadd.f32 %v239, %v65
    %v248 = vadd.f32 %v240, %v66
    %v249 = vadd.f32 %v241, %v67
    %v250 = vadd.f32 %v242, %v68
    %v251 = vadd.f32 %v243, %v69
    %v252 = vadd.f32 %v244, %v70
    %s253 = smul.addr %s171, 8
    %s254 = scalar_lea.vmem [#allocation7], %s253
    %255 = vst [vmem:[%s254] sm:$0xff] %v245
    %256 = vst [vmem:[%s254 + $0x8] sm:$0xff] %v246
    %257 = vst [vmem:[%s254 + $0x10] sm:$0xff] %v247
    %258 = vst [vmem:[%s254 + $0x18] sm:$0xff] %v248
    %259 = vst [vmem:[%s254 + $0x20] sm:$0xff] %v249
    %260 = vst [vmem:[%s254 + $0x28] sm:$0xff] %v250
    %261 = vst [vmem:[%s254 + $0x30] sm:$0xff] %v251
    %262 = vst [vmem:[%s254 + $0x38] sm:$0xff] %v252
    %s263 = smul.u32 2, 8
    %s264 = smul.addr %s263, 8
    %s265 = scalar_lea.vmem [#allocation2], %s264
    %v266 = vld [vmem:[%s265] sm:$0xff]
    %v267 = vld [vmem:[%s265 + $0x8] sm:$0xff]
    %v268 = vld [vmem:[%s265 + $0x10] sm:$0xff]
    %v269 = vld [vmem:[%s265 + $0x18] sm:$0xff]
    %v270 = vld [vmem:[%s265 + $0x20] sm:$0xff]
    %v271 = vld [vmem:[%s265 + $0x28] sm:$0xff]
    %v272 = vld [vmem:[%s265 + $0x30] sm:$0xff]
    %v273 = vld [vmem:[%s265 + $0x38] sm:$0xff]
    %v274 = vadd.f32 %v266, %v267
    %v275 = vadd.f32 %v274, %v268
    %v276 = vadd.f32 %v275, %v269
    %v277 = vadd.f32 %v276, %v270
    %v278 = vadd.f32 %v277, %v271
    %v279 = vadd.f32 %v278, %v272
    %v280 = vadd.f32 %v279, %v273
    %281 = vadd.xlane.f32.xlu0 %v280
    %v282 = vpop.xlane.xlu0 %281
    %v283 = vmul.f32 %v282, 0.0009765625
    %v284 = vsub.f32 %v266, %v283
    %v285 = vsub.f32 %v267, %v283
    %v286 = vsub.f32 %v268, %v283
    %v287 = vsub.f32 %v269, %v283
    %v288 = vsub.f32 %v270, %v283
    %v289 = vsub.f32 %v271, %v283
    %v290 = vsub.f32 %v272, %v283
    %v291 = vsub.f32 %v273, %v283
    %v292 = vmul.f32 %v284, %v284
    %v293 = vmul.f32 %v285, %v285
    %v294 = vmul.f32 %v286, %v286
    %v295 = vmul.f32 %v287, %v287
    %v296 = vmul.f32 %v288, %v288
    %v297 = vmul.f32 %v289, %v289
    %v298 = vmul.f32 %v290, %v290
    %v299 = vmul.f32 %v291, %v291
    %v300 = vadd.f32 %v292, %v293
    %v301 = vadd.f32 %v300, %v294
    %v302 = vadd.f32 %v301, %v295
    %v303 = vadd.f32 %v302, %v296
    %v304 = vadd.f32 %v303, %v297
    %v305 = vadd.f32 %v304, %v298
    %v306 = vadd.f32 %v305, %v299
    %307 = vadd.xlane.f32.xlu0 %v306
    %v308 = vpop.xlane.xlu0 %307
    %v309 = vmul.f32 %v308, 0.0009765625
    %v310 = vadd.f32 %v309, 1e-05
    %v311 = vrsqrt.pop %v310
    %v312 = vmul.f32 %v311, %v310
    %v313 = vmul.f32 %v312, %v311
    %v314 = vmul.f32 0.5, %v313
    %v315 = vsub.f32 1.5, %v314
    %v316 = vmul.f32 %v311, %v315
    %vm317 = vweird.f32 %v310
    %vm318 = vweird.f32 %v311
    %vm319 = vmor %vm317, %vm318
    %v320 = vsel %vm319, %v311, %v316
    %v321 = vmul.f32 %v284, %v320
    %v322 = vmul.f32 %v285, %v320
    %v323 = vmul.f32 %v286, %v320
    %v324 = vmul.f32 %v287, %v320
    %v325 = vmul.f32 %v288, %v320
    %v326 = vmul.f32 %v289, %v320
    %v327 = vmul.f32 %v290, %v320
    %v328 = vmul.f32 %v291, %v320
    %v329 = vmul.f32 %v321, %v44
    %v330 = vmul.f32 %v322, %v45
    %v331 = vmul.f32 %v323, %v46
    %v332 = vmul.f32 %v324, %v47
    %v333 = vmul.f32 %v325, %v48
    %v334 = vmul.f32 %v326, %v49
    %v335 = vmul.f32 %v327, %v50
    %v336 = vmul.f32 %v328, %v51
    %v337 = vadd.f32 %v329, %v63
    %v338 = vadd.f32 %v330, %v64
    %v339 = vadd.f32 %v331, %v65
    %v340 = vadd.f32 %v332, %v66
    %v341 = vadd.f32 %v333, %v67
    %v342 = vadd.f32 %v334, %v68
    %v343 = vadd.f32 %v335, %v69
    %v344 = vadd.f32 %v336, %v70
    %s345 = smul.addr %s263, 8
    %s346 = scalar_lea.vmem [#allocation7], %s345
    %347 = vst [vmem:[%s346] sm:$0xff] %v337
    %348 = vst [vmem:[%s346 + $0x8] sm:$0xff] %v338
    %349 = vst [vmem:[%s346 + $0x10] sm:$0xff] %v339
    %350 = vst [vmem:[%s346 + $0x18] sm:$0xff] %v340
    %351 = vst [vmem:[%s346 + $0x20] sm:$0xff] %v341
    %352 = vst [vmem:[%s346 + $0x28] sm:$0xff] %v342
    %353 = vst [vmem:[%s346 + $0x30] sm:$0xff] %v343
    %354 = vst [vmem:[%s346 + $0x38] sm:$0xff] %v344
    %s355 = smul.u32 3, 8
    %s356 = smul.addr %s355, 8
    %s357 = scalar_lea.vmem [#allocation2], %s356
    %v358 = vld [vmem:[%s357] sm:$0xff]
    %v359 = vld [vmem:[%s357 + $0x8] sm:$0xff]
    %v360 = vld [vmem:[%s357 + $0x10] sm:$0xff]
    %v361 = vld [vmem:[%s357 + $0x18] sm:$0xff]
    %v362 = vld [vmem:[%s357 + $0x20] sm:$0xff]
    %v363 = vld [vmem:[%s357 + $0x28] sm:$0xff]
    %v364 = vld [vmem:[%s357 + $0x30] sm:$0xff]
    %v365 = vld [vmem:[%s357 + $0x38] sm:$0xff]
    %v366 = vadd.f32 %v358, %v359
    %v367 = vadd.f32 %v366, %v360
    %v368 = vadd.f32 %v367, %v361
    %v369 = vadd.f32 %v368, %v362
    %v370 = vadd.f32 %v369, %v363
    %v371 = vadd.f32 %v370, %v364
    %v372 = vadd.f32 %v371, %v365
    %373 = vadd.xlane.f32.xlu0 %v372
    %v374 = vpop.xlane.xlu0 %373
    %v375 = vmul.f32 %v374, 0.0009765625
    %v376 = vsub.f32 %v358, %v375
    %v377 = vsub.f32 %v359, %v375
    %v378 = vsub.f32 %v360, %v375
    %v379 = vsub.f32 %v361, %v375
    %v380 = vsub.f32 %v362, %v375
    %v381 = vsub.f32 %v363, %v375
    %v382 = vsub.f32 %v364, %v375
    %v383 = vsub.f32 %v365, %v375
    %v384 = vmul.f32 %v376, %v376
    %v385 = vmul.f32 %v377, %v377
    %v386 = vmul.f32 %v378, %v378
    %v387 = vmul.f32 %v379, %v379
    %v388 = vmul.f32 %v380, %v380
    %v389 = vmul.f32 %v381, %v381
    %v390 = vmul.f32 %v382, %v382
    %v391 = vmul.f32 %v383, %v383
    %v392 = vadd.f32 %v384, %v385
    %v393 = vadd.f32 %v392, %v386
    %v394 = vadd.f32 %v393, %v387
    %v395 = vadd.f32 %v394, %v388
    %v396 = vadd.f32 %v395, %v389
    %v397 = vadd.f32 %v396, %v390
    %v398 = vadd.f32 %v397, %v391
    %399 = vadd.xlane.f32.xlu0 %v398
    %v400 = vpop.xlane.xlu0 %399
    %v401 = vmul.f32 %v400, 0.0009765625
    %v402 = vadd.f32 %v401, 1e-05
    %v403 = vrsqrt.pop %v402
    %v404 = vmul.f32 %v403, %v402
    %v405 = vmul.f32 %v404, %v403
    %v406 = vmul.f32 0.5, %v405
    %v407 = vsub.f32 1.5, %v406
    %v408 = vmul.f32 %v403, %v407
    %vm409 = vweird.f32 %v402
    %vm410 = vweird.f32 %v403
    %vm411 = vmor %vm409, %vm410
    %v412 = vsel %vm411, %v403, %v408
    %v413 = vmul.f32 %v376, %v412
    %v414 = vmul.f32 %v377, %v412
    %v415 = vmul.f32 %v378, %v412
    %v416 = vmul.f32 %v379, %v412
    %v417 = vmul.f32 %v380, %v412
    %v418 = vmul.f32 %v381, %v412
    %v419 = vmul.f32 %v382, %v412
    %v420 = vmul.f32 %v383, %v412
    %v421 = vmul.f32 %v413, %v44
    %v422 = vmul.f32 %v414, %v45
    %v423 = vmul.f32 %v415, %v46
    %v424 = vmul.f32 %v416, %v47
    %v425 = vmul.f32 %v417, %v48
    %v426 = vmul.f32 %v418, %v49
    %v427 = vmul.f32 %v419, %v50
    %v428 = vmul.f32 %v420, %v51
    %v429 = vadd.f32 %v421, %v63
    %v430 = vadd.f32 %v422, %v64
    %v431 = vadd.f32 %v423, %v65
    %v432 = vadd.f32 %v424, %v66
    %v433 = vadd.f32 %v425, %v67
    %v434 = vadd.f32 %v426, %v68
    %v435 = vadd.f32 %v427, %v69
    %v436 = vadd.f32 %v428, %v70
    %s437 = smul.addr %s355, 8
    %s438 = scalar_lea.vmem [#allocation7], %s437
    %439 = vst [vmem:[%s438] sm:$0xff] %v429
    %440 = vst [vmem:[%s438 + $0x8] sm:$0xff] %v430
    %441 = vst [vmem:[%s438 + $0x10] sm:$0xff] %v431
    %442 = vst [vmem:[%s438 + $0x18] sm:$0xff] %v432
    %443 = vst [vmem:[%s438 + $0x20] sm:$0xff] %v433
    %444 = vst [vmem:[%s438 + $0x28] sm:$0xff] %v434
    %445 = vst [vmem:[%s438 + $0x30] sm:$0xff] %v435
    %446 = vst [vmem:[%s438 + $0x38] sm:$0xff] %v436
    %s447 = smul.u32 4, 8
    %s448 = smul.addr %s447, 8
    %s449 = scalar_lea.vmem [#allocation2], %s448
    %v450 = vld [vmem:[%s449] sm:$0xff]
    %v451 = vld [vmem:[%s449 + $0x8] sm:$0xff]
    %v452 = vld [vmem:[%s449 + $0x10] sm:$0xff]
    %v453 = vld [vmem:[%s449 + $0x18] sm:$0xff]
    %v454 = vld [vmem:[%s449 + $0x20] sm:$0xff]
    %v455 = vld [vmem:[%s449 + $0x28] sm:$0xff]
    %v456 = vld [vmem:[%s449 + $0x30] sm:$0xff]
    %v457 = vld [vmem:[%s449 + $0x38] sm:$0xff]
    %v458 = vadd.f32 %v450, %v451
    %v459 = vadd.f32 %v458, %v452
    %v460 = vadd.f32 %v459, %v453
    %v461 = vadd.f32 %v460, %v454
    %v462 = vadd.f32 %v461, %v455
    %v463 = vadd.f32 %v462, %v456
    %v464 = vadd.f32 %v463, %v457
    %465 = vadd.xlane.f32.xlu0 %v464
    %v466 = vpop.xlane.xlu0 %465
    %v467 = vmul.f32 %v466, 0.0009765625
    %v468 = vsub.f32 %v450, %v467
    %v469 = vsub.f32 %v451, %v467
    %v470 = vsub.f32 %v452, %v467
    %v471 = vsub.f32 %v453, %v467
    %v472 = vsub.f32 %v454, %v467
    %v473 = vsub.f32 %v455, %v467
    %v474 = vsub.f32 %v456, %v467
    %v475 = vsub.f32 %v457, %v467
    %v476 = vmul.f32 %v468, %v468
    %v477 = vmul.f32 %v469, %v469
    %v478 = vmul.f32 %v470, %v470
    %v479 = vmul.f32 %v471, %v471
    %v480 = vmul.f32 %v472, %v472
    %v481 = vmul.f32 %v473, %v473
    %v482 = vmul.f32 %v474, %v474
    %v483 = vmul.f32 %v475, %v475
    %v484 = vadd.f32 %v476, %v477
    %v485 = vadd.f32 %v484, %v478
    %v486 = vadd.f32 %v485, %v479
    %v487 = vadd.f32 %v486, %v480
    %v488 = vadd.f32 %v487, %v481
    %v489 = vadd.f32 %v488, %v482
    %v490 = vadd.f32 %v489, %v483
    %491 = vadd.xlane.f32.xlu0 %v490
    %v492 = vpop.xlane.xlu0 %491
    %v493 = vmul.f32 %v492, 0.0009765625
    %v494 = vadd.f32 %v493, 1e-05
    %v495 = vrsqrt.pop %v494
    %v496 = vmul.f32 %v495, %v494
    %v497 = vmul.f32 %v496, %v495
    %v498 = vmul.f32 0.5, %v497
    %v499 = vsub.f32 1.5, %v498
    %v500 = vmul.f32 %v495, %v499
    %vm501 = vweird.f32 %v494
    %vm502 = vweird.f32 %v495
    %vm503 = vmor %vm501, %vm502
    %v504 = vsel %vm503, %v495, %v500
    %v505 = vmul.f32 %v468, %v504
    %v506 = vmul.f32 %v469, %v504
    %v507 = vmul.f32 %v470, %v504
    %v508 = vmul.f32 %v471, %v504
    %v509 = vmul.f32 %v472, %v504
    %v510 = vmul.f32 %v473, %v504
    %v511 = vmul.f32 %v474, %v504
    %v512 = vmul.f32 %v475, %v504
    %v513 = vmul.f32 %v505, %v44
    %v514 = vmul.f32 %v506, %v45
    %v515 = vmul.f32 %v507, %v46
    %v516 = vmul.f32 %v508, %v47
    %v517 = vmul.f32 %v509, %v48
    %v518 = vmul.f32 %v510, %v49
    %v519 = vmul.f32 %v511, %v50
    %v520 = vmul.f32 %v512, %v51
    %v521 = vadd.f32 %v513, %v63
    %v522 = vadd.f32 %v514, %v64
    %v523 = vadd.f32 %v515, %v65
    %v524 = vadd.f32 %v516, %v66
    %v525 = vadd.f32 %v517, %v67
    %v526 = vadd.f32 %v518, %v68
    %v527 = vadd.f32 %v519, %v69
    %v528 = vadd.f32 %v520, %v70
    %s529 = smul.addr %s447, 8
    %s530 = scalar_lea.vmem [#allocation7], %s529
    %531 = vst [vmem:[%s530] sm:$0xff] %v521
    %532 = vst [vmem:[%s530 + $0x8] sm:$0xff] %v522
    %533 = vst [vmem:[%s530 + $0x10] sm:$0xff] %v523
    %534 = vst [vmem:[%s530 + $0x18] sm:$0xff] %v524
    %535 = vst [vmem:[%s530 + $0x20] sm:$0xff] %v525
    %536 = vst [vmem:[%s530 + $0x28] sm:$0xff] %v526
    %537 = vst [vmem:[%s530 + $0x30] sm:$0xff] %v527
    %538 = vst [vmem:[%s530 + $0x38] sm:$0xff] %v528
    %s539 = smul.u32 5, 8
    %s540 = smul.addr %s539, 8
    %s541 = scalar_lea.vmem [#allocation2], %s540
    %v542 = vld [vmem:[%s541] sm:$0xff]
    %v543 = vld [vmem:[%s541 + $0x8] sm:$0xff]
    %v544 = vld [vmem:[%s541 + $0x10] sm:$0xff]
    %v545 = vld [vmem:[%s541 + $0x18] sm:$0xff]
    %v546 = vld [vmem:[%s541 + $0x20] sm:$0xff]
    %v547 = vld [vmem:[%s541 + $0x28] sm:$0xff]
    %v548 = vld [vmem:[%s541 + $0x30] sm:$0xff]
    %v549 = vld [vmem:[%s541 + $0x38] sm:$0xff]
    %v550 = vadd.f32 %v542, %v543
    %v551 = vadd.f32 %v550, %v544
    %v552 = vadd.f32 %v551, %v545
    %v553 = vadd.f32 %v552, %v546
    %v554 = vadd.f32 %v553, %v547
    %v555 = vadd.f32 %v554, %v548
    %v556 = vadd.f32 %v555, %v549
    %557 = vadd.xlane.f32.xlu0 %v556
    %v558 = vpop.xlane.xlu0 %557
    %v559 = vmul.f32 %v558, 0.0009765625
    %v560 = vsub.f32 %v542, %v559
    %v561 = vsub.f32 %v543, %v559
    %v562 = vsub.f32 %v544, %v559
    %v563 = vsub.f32 %v545, %v559
    %v564 = vsub.f32 %v546, %v559
    %v565 = vsub.f32 %v547, %v559
    %v566 = vsub.f32 %v548, %v559
    %v567 = vsub.f32 %v549, %v559
    %v568 = vmul.f32 %v560, %v560
    %v569 = vmul.f32 %v561, %v561
    %v570 = vmul.f32 %v562, %v562
    %v571 = vmul.f32 %v563, %v563
    %v572 = vmul.f32 %v564, %v564
    %v573 = vmul.f32 %v565, %v565
    %v574 = vmul.f32 %v566, %v566
    %v575 = vmul.f32 %v567, %v567
    %v576 = vadd.f32 %v568, %v569
    %v577 = vadd.f32 %v576, %v570
    %v578 = vadd.f32 %v577, %v571
    %v579 = vadd.f32 %v578, %v572
    %v580 = vadd.f32 %v579, %v573
    %v581 = vadd.f32 %v580, %v574
    %v582 = vadd.f32 %v581, %v575
    %583 = vadd.xlane.f32.xlu0 %v582
    %v584 = vpop.xlane.xlu0 %583
    %v585 = vmul.f32 %v584, 0.0009765625
    %v586 = vadd.f32 %v585, 1e-05
    %v587 = vrsqrt.pop %v586
    %v588 = vmul.f32 %v587, %v586
    %v589 = vmul.f32 %v588, %v587
    %v590 = vmul.f32 0.5, %v589
    %v591 = vsub.f32 1.5, %v590
    %v592 = vmul.f32 %v587, %v591
    %vm593 = vweird.f32 %v586
    %vm594 = vweird.f32 %v587
    %vm595 = vmor %vm593, %vm594
    %v596 = vsel %vm595, %v587, %v592
    %v597 = vmul.f32 %v560, %v596
    %v598 = vmul.f32 %v561, %v596
    %v599 = vmul.f32 %v562, %v596
    %v600 = vmul.f32 %v563, %v596
    %v601 = vmul.f32 %v564, %v596
    %v602 = vmul.f32 %v565, %v596
    %v603 = vmul.f32 %v566, %v596
    %v604 = vmul.f32 %v567, %v596
    %v605 = vmul.f32 %v597, %v44
    %v606 = vmul.f32 %v598, %v45
    %v607 = vmul.f32 %v599, %v46
    %v608 = vmul.f32 %v600, %v47
    %v609 = vmul.f32 %v601, %v48
    %v610 = vmul.f32 %v602, %v49
    %v611 = vmul.f32 %v603, %v50
    %v612 = vmul.f32 %v604, %v51
    %v613 = vadd.f32 %v605, %v63
    %v614 = vadd.f32 %v606, %v64
    %v615 = vadd.f32 %v607, %v65
    %v616 = vadd.f32 %v608, %v66
    %v617 = vadd.f32 %v609, %v67
    %v618 = vadd.f32 %v610, %v68
    %v619 = vadd.f32 %v611, %v69
    %v620 = vadd.f32 %v612, %v70
    %s621 = smul.addr %s539, 8
    %s622 = scalar_lea.vmem [#allocation7], %s621
    %623 = vst [vmem:[%s622] sm:$0xff] %v613
    %624 = vst [vmem:[%s622 + $0x8] sm:$0xff] %v614
    %625 = vst [vmem:[%s622 + $0x10] sm:$0xff] %v615
    %626 = vst [vmem:[%s622 + $0x18] sm:$0xff] %v616
    %627 = vst [vmem:[%s622 + $0x20] sm:$0xff] %v617
    %628 = vst [vmem:[%s622 + $0x28] sm:$0xff] %v618
    %629 = vst [vmem:[%s622 + $0x30] sm:$0xff] %v619
    %630 = vst [vmem:[%s622 + $0x38] sm:$0xff] %v620
    %s631 = scalar_lea.vmem [#allocation2], 384
    %v632 = vld [vmem:[%s631] ss:$8 sm:$0xf]
    %v633 = vld [vmem:[%s631] ss:$8 sm:$0xf0]
    %v634 = vor.u32 %v632, %v633
    %v636 = vperm.slane %v634, 0
    %v637 = vperm.slane %v634, 1
    %v638 = vperm.slane %v634, 2
    %v639 = vperm.slane %v634, 3
    %v640 = vperm.slane %v634, 4
    %v641 = vperm.slane %v634, 5
    %v642 = vperm.slane %v634, 6
    %v643 = vperm.slane %v634, 7
    %vm652 = vcmask 1040384
    %v653 = vsel %vm652, %v636, 0.0
    %v654 = vsel %vm652, %v637, 0.0
    %v655 = vadd.f32 %v653, %v654
    %v656 = vsel %vm652, %v638, 0.0
    %v657 = vadd.f32 %v655, %v656
    %v658 = vsel %vm652, %v639, 0.0
    %v659 = vadd.f32 %v657, %v658
    %v660 = vsel %vm652, %v640, 0.0
    %v661 = vadd.f32 %v659, %v660
    %v662 = vsel %vm652, %v641, 0.0
    %v663 = vadd.f32 %v661, %v662
    %v664 = vsel %vm652, %v642, 0.0
    %v665 = vadd.f32 %v663, %v664
    %v666 = vsel %vm652, %v643, 0.0
    %v667 = vadd.f32 %v665, %v666
    %668 = vadd.xlane.f32.xlu0 %v667
    %v669 = vpop.xlane.xlu0 %668
    %v670 = vmul.f32 %v669, 0.0009765625
    %v672 = vperm.slane %v670, 0
    %v674 = vsub.f32 %v634, %v672
    %v675 = vmul.f32 %v674, %v674
    %v677 = vperm.slane %v675, 0
    %v678 = vperm.slane %v675, 1
    %v679 = vperm.slane %v675, 2
    %v680 = vperm.slane %v675, 3
    %v681 = vperm.slane %v675, 4
    %v682 = vperm.slane %v675, 5
    %v683 = vperm.slane %v675, 6
    %v684 = vperm.slane %v675, 7
    %v693 = vsel %vm652, %v677, 0.0
    %v694 = vsel %vm652, %v678, 0.0
    %v695 = vadd.f32 %v693, %v694
    %v696 = vsel %vm652, %v679, 0.0
    %v697 = vadd.f32 %v695, %v696
    %v698 = vsel %vm652, %v680, 0.0
    %v699 = vadd.f32 %v697, %v698
    %v700 = vsel %vm652, %v681, 0.0
    %v701 = vadd.f32 %v699, %v700
    %v702 = vsel %vm652, %v682, 0.0
    %v703 = vadd.f32 %v701, %v702
    %v704 = vsel %vm652, %v683, 0.0
    %v705 = vadd.f32 %v703, %v704
    %v706 = vsel %vm652, %v684, 0.0
    %v707 = vadd.f32 %v705, %v706
    %708 = vadd.xlane.f32.xlu0 %v707
    %v709 = vpop.xlane.xlu0 %708
    %v710 = vmul.f32 %v709, 0.0009765625
    %v711 = vadd.f32 %v710, 1e-05
    %v712 = vrsqrt.pop %v711
    %v713 = vmul.f32 %v712, %v711
    %v714 = vmul.f32 %v713, %v712
    %v715 = vmul.f32 0.5, %v714
    %v716 = vsub.f32 1.5, %v715
    %v717 = vmul.f32 %v712, %v716
    %vm718 = vweird.f32 %v711
    %vm719 = vweird.f32 %v712
    %vm720 = vmor %vm718, %vm719
    %v721 = vsel %vm720, %v712, %v717
    %v723 = vperm.slane %v721, 0
    %v725 = vmul.f32 %v674, %v723
    %v726 = vmul.f32 %v725, %v42
    %v727 = vadd.f32 %v726, %v61
    %s728 = scalar_lea.vmem [#allocation7], 384
    %729 = vst [vmem:[%s728] ss:$8 sm:$0xf] %v727
    %730 = vst [vmem:[%s728] ss:$8 sm:$0xf0] %v727
    // Predicated region
    $region18: #{tpu_custom_call.1} parent=1 // pred_check
      _
    $region19: #{tpu_custom_call.1} parent=1 // pred_check_branch
      %732 = sbr.rel (0) target = $region21
    $region20: #{tpu_custom_call.1} parent=1 // pred_region
      %734 = vsyncadd [#allocation4], 0
      %s735 = sshll.u32 [#allocation7], 4
      %s736 = int_to_ptr.vmem [resolvable:$true] %s735
      %s737 = sshll.u32 %s2, 4
      %s738 = int_to_ptr.hbm [resolvable:$true] %s737
      %743 = dma.vmem_to_hbm [thread:$0]  %s736, 7168, %s738, [#allocation4], 1024, 1024, 64
    $region21: #{tpu_custom_call.1} parent=1 // pred_fallthru
      _
    // Predicated region
    $region22: #{tpu_custom_call.1} parent=1 // pred_check
      _
    $region23: #{tpu_custom_call.1} parent=1 // pred_check_branch
      %745 = sbr.rel (0) target = $region25
    $region24: #{tpu_custom_call.1} parent=1 // pred_region
      %747 = dma.done [#allocation4], 7168
    $region25: #{tpu_custom_call.1} parent=1 // pred_fallthru
      _
    %748 = vsyncpa [#allocation3], 1
    %749 = vsyncpa [#allocation6], 1
    %750 = vsyncpa [#allocation4], 1

</llo_original>
